<compile_context>
chip_gen: v7x
topology: tpu7x:2x2x1
jax: 0.10.0
libtpu: 0.0.40
codegen_flags: <defaults>
</compile_context>

<pallas_src>
import functools

import jax
import jax.numpy as jnp
from jax.experimental import pallas as pl
from jax.experimental.pallas import tpu as pltpu

NEG_SLOPE = 0.01   # F.leaky_relu default negative_slope
DROPOUT_P = 0.1    # GANDiscriminator(dropout=0.1); F.dropout defaults to training=True


def _discriminator_kernel(x_ref, adj_ref, mask_ref, drop_ref, *rest, num_layers):
    # rest = [W_cat_0, b_rel_0, W_cat_1, b_rel_1, ..., W_st, b_st, out_ref]
    weight_refs = rest[:-1]
    out_ref = rest[-1]

    tb, n, _ = x_ref.shape

    adj = adj_ref[...]                                        # (TB, N, N)   bf16
    mask = mask_ref[...].reshape(tb * n, 1)                   # (TB*N, 1)    f32
    h = x_ref[...].astype(jnp.float32).reshape(tb * n, -1)    # (TB*N, F_in) f32

    # ---- stacked DenseGraphConv layers (k-GNN), leaky_relu activation ----
    #   out = lin_rel(adj @ h) + lin_root(h);  out = out * mask;  h = leaky_relu(out)
    for l in range(num_layers):
        w_cat = weight_refs[2 * l][...]                       # (2*F_in, F_out) bf16
        b_rel = weight_refs[2 * l + 1][...]                   # (1, F_out)      f32
        fin = h.shape[-1]

        # neighbor aggregation: adj @ h  (batched over graphs)
        agg = jnp.einsum(
            "bnm,bmf->bnf",
            adj,
            h.reshape(tb, n, fin).astype(jnp.bfloat16),
            preferred_element_type=jnp.float32,
        ).reshape(tb * n, fin)

        # fused rel/root matmul on the flattened (TB*N, 2F) operand
        hcat = jnp.concatenate([agg, h], axis=-1).astype(jnp.bfloat16)
        out = jnp.dot(hcat, w_cat, preferred_element_type=jnp.float32) + b_rel
        out = out * mask                                      # node-existence mask
        h = jnp.maximum(out, NEG_SLOPE * out)                 # leaky_relu

    # ---- dropout (p=0.1, training semantics; scale already folded into drop_ref) ----
    h = h * drop_ref[...].reshape(tb * n, -1)

    # ---- GraphAggregation: sum_n sigmoid(Lin(h)) * tanh(Lin(h)) (heads fused) ----
    w_st = weight_refs[2 * num_layers][...]                   # (agg_dim, 2) bf16
    b_st = weight_refs[2 * num_layers + 1][...]               # (1, 2)       f32
    z = jnp.dot(h.astype(jnp.bfloat16), w_st,
                preferred_element_type=jnp.float32) + b_st    # (TB*N, 2)
    prod = jax.nn.sigmoid(z[:, 0:1]) * jnp.tanh(z[:, 1:2])    # (TB*N, 1)
    out_ref[...] = jnp.sum(prod.reshape(tb, n, 1), axis=1)    # (TB, 1)


def init_params(key, x_dim, gcn_dims, agg_dim):
    dims = [x_dim] + list(gcn_dims) + [agg_dim]
    params = {"dgc": [], "agg": {}}
    for fin, fout in zip(dims, dims[1:]):
        key, k1, k2, k3 = jax.random.split(key, 4)
        s = 1.0 / jnp.sqrt(fin)
        w_rel = jax.random.uniform(k1, (fin, fout), jnp.float32, -s, s)
        b_rel = jax.random.uniform(k2, (1, fout), jnp.float32, -s, s)
        w_root = jax.random.uniform(k3, (fin, fout), jnp.float32, -s, s)
        params["dgc"].append((w_rel, b_rel, w_root))
    key, k1, k2, k3, k4 = jax.random.split(key, 5)
    s = 1.0 / jnp.sqrt(agg_dim)
    params["agg"]["ws"] = jax.random.uniform(k1, (agg_dim, 1), jnp.float32, -s, s)
    params["agg"]["bs"] = jax.random.uniform(k2, (1, 1), jnp.float32, -s, s)
    params["agg"]["wt"] = jax.random.uniform(k3, (agg_dim, 1), jnp.float32, -s, s)
    params["agg"]["bt"] = jax.random.uniform(k4, (1, 1), jnp.float32, -s, s)
    return params


def gan_discriminator_forward(params, x, w_adj, mask, dropout_key, training=True):
    B, N, x_dim = x.shape
    num_layers = len(params["dgc"])
    agg_dim = params["agg"]["ws"].shape[0]

    # ---- fuse + precast weights (host side, done once per call) ----
    flat_weights = []
    for (w_rel, b_rel, w_root) in params["dgc"]:
        w_cat = jnp.concatenate([w_rel, w_root], axis=0).astype(jnp.bfloat16)  # (2F, Fo)
        flat_weights += [w_cat, b_rel.astype(jnp.float32)]
    w_st = jnp.concatenate([params["agg"]["ws"], params["agg"]["wt"]],
                           axis=1).astype(jnp.bfloat16)                        # (agg, 2)
    b_st = jnp.concatenate([params["agg"]["bs"], params["agg"]["bt"]],
                           axis=1).astype(jnp.float32)                         # (1, 2)
    flat_weights += [w_st, b_st]

    # ---- inputs: adj in bf16 (halves HBM traffic of the biggest tensor) ----
    adj_bf = w_adj.astype(jnp.bfloat16)
    mask3 = mask.reshape(B, N, 1).astype(jnp.float32)
    x_f32 = x.astype(jnp.float32)

    # dropout scale mask (F.dropout default: training=True, scale by 1/(1-p))
    if training and DROPOUT_P > 0.0:
        keep = jax.random.bernoulli(dropout_key, 1.0 - DROPOUT_P, (B, N, agg_dim))
        drop_scale = keep.astype(jnp.float32) * (1.0 / (1.0 - DROPOUT_P))
    else:
        drop_scale = jnp.ones((B, N, agg_dim), jnp.float32)

    # ---- batch blocking: TB graphs per grid step ----
    TB = B if B <= 64 else 64
    Bp = ((B + TB - 1) // TB) * TB
    if Bp != B:
        pad = Bp - B
        x_f32 = jnp.pad(x_f32, ((0, pad), (0, 0), (0, 0)))
        adj_bf = jnp.pad(adj_bf, ((0, pad), (0, 0), (0, 0)))
        mask3 = jnp.pad(mask3, ((0, pad), (0, 0), (0, 0)))
        drop_scale = jnp.pad(drop_scale, ((0, pad), (0, 0), (0, 0)))

    def full_spec(arr):
        # whole array resident in VMEM, same block for every grid step
        return pl.BlockSpec(arr.shape, lambda b, nd=arr.ndim: (0,) * nd)

    in_specs = [
        pl.BlockSpec((TB, N, x_dim), lambda b: (b, 0, 0)),    # x
        pl.BlockSpec((TB, N, N), lambda b: (b, 0, 0)),        # w_adj (bf16)
        pl.BlockSpec((TB, N, 1), lambda b: (b, 0, 0)),        # mask
        pl.BlockSpec((TB, N, agg_dim), lambda b: (b, 0, 0)),  # dropout scale
    ] + [full_spec(w) for w in flat_weights]

    out = pl.pallas_call(
        functools.partial(_discriminator_kernel, num_layers=num_layers),
        out_shape=jax.ShapeDtypeStruct((Bp, 1), jnp.float32),
        grid_spec=pltpu.PrefetchScalarGridSpec(
            num_scalar_prefetch=0,
            grid=(Bp // TB,),
            in_specs=in_specs,
            out_specs=pl.BlockSpec((TB, 1), lambda b: (b, 0)),
        ),
        compiler_params=pltpu.CompilerParams(
            # batch-block axis is independent -> shard across TCs on v7x
            dimension_semantics=("parallel",)),
    )(x_f32, adj_bf, mask3, drop_scale, *flat_weights)

    return out[:B].reshape(B, 1)


if __name__ == "__main__":
    key = jax.random.PRNGKey(0)

    # small, module-consistent shapes
    B, N = 2, 16
    x_dim, gcn_dims, agg_dim = 8, [16], 32

    key, kp, kx, ka, kd = jax.random.split(key, 5)
    params = init_params(kp, x_dim, gcn_dims, agg_dim)

    x = jax.random.normal(kx, (B, N, x_dim), jnp.float32)
    w_adj = jax.random.uniform(ka, (B, N, N), jnp.float32)
    w_adj = 0.5 * (w_adj + jnp.transpose(w_adj, (0, 2, 1)))  # symmetric weighted adjacency
    lengths = jnp.array([16, 12], dtype=jnp.int32)
    mask = (jnp.arange(N)[None, :] < lengths[:, None]).astype(jnp.float32)  # (B, N)

    out = gan_discriminator_forward(params, x, w_adj, mask, dropout_key=kd, training=True)
    jax.block_until_ready(out)
    assert out.shape == (B, 1)
    print("KERNEL_OK")
</pallas_src>

<mosaic_0001>
module attributes {stable_mosaic.version = 11 : i64} {
  func.func @_discriminator_kernel(%arg0: i32, %arg1: memref<2x16x8xf32, #tpu.memory_space<vmem>>, %arg2: memref<2x16x16xbf16, #tpu.memory_space<vmem>>, %arg3: memref<2x16x1xf32, #tpu.memory_space<vmem>>, %arg4: memref<2x16x32xf32, #tpu.memory_space<vmem>>, %arg5: memref<16x16xbf16, #tpu.memory_space<vmem>>, %arg6: memref<1x16xf32, #tpu.memory_space<vmem>>, %arg7: memref<32x32xbf16, #tpu.memory_space<vmem>>, %arg8: memref<1x32xf32, #tpu.memory_space<vmem>>, %arg9: memref<32x2xbf16, #tpu.memory_space<vmem>>, %arg10: memref<1x2xf32, #tpu.memory_space<vmem>>, %arg11: memref<2x1xf32, #tpu.memory_space<vmem>>) attributes {dimension_semantics = [#tpu.dimension_semantics<parallel>], iteration_bounds = array<i64: 1>, scalar_prefetch = 0 : i64, scratch_operands = 0 : i64, tpu.core_type = #tpu.core_type<tc>, window_params = [{transform_indices = @transform_0, window_bounds = array<i64: 2, 16, 8>}, {transform_indices = @transform_1, window_bounds = array<i64: 2, 16, 16>}, {transform_indices = @transform_2, window_bounds = array<i64: 2, 16, 1>}, {transform_indices = @transform_3, window_bounds = array<i64: 2, 16, 32>}, {pipeline_mode = #tpu.pipeline_mode<synchronous>, transform_indices = @transform_4, window_bounds = array<i64: 16, 16>}, {pipeline_mode = #tpu.pipeline_mode<synchronous>, transform_indices = @transform_5, window_bounds = array<i64: 1, 16>}, {pipeline_mode = #tpu.pipeline_mode<synchronous>, transform_indices = @transform_6, window_bounds = array<i64: 32, 32>}, {pipeline_mode = #tpu.pipeline_mode<synchronous>, transform_indices = @transform_7, window_bounds = array<i64: 1, 32>}, {pipeline_mode = #tpu.pipeline_mode<synchronous>, transform_indices = @transform_8, window_bounds = array<i64: 32, 2>}, {pipeline_mode = #tpu.pipeline_mode<synchronous>, transform_indices = @transform_9, window_bounds = array<i64: 1, 2>}, {transform_indices = @transform_10, window_bounds = array<i64: 2, 1>}]} {
    %c0 = arith.constant 0 : index
    %c0_0 = arith.constant 0 : index
    %c0_1 = arith.constant 0 : index
    %0 = vector.load %arg2[%c0, %c0_0, %c0_1] : memref<2x16x16xbf16, #tpu.memory_space<vmem>>, vector<2x16x16xbf16>
    %c0_2 = arith.constant 0 : index
    %c0_3 = arith.constant 0 : index
    %c0_4 = arith.constant 0 : index
    %1 = vector.load %arg3[%c0_2, %c0_3, %c0_4] : memref<2x16x1xf32, #tpu.memory_space<vmem>>, vector<2x16x1xf32>
    %2 = vector.shape_cast %1 : vector<2x16x1xf32> to vector<32x1xf32>
    %c0_5 = arith.constant 0 : index
    %c0_6 = arith.constant 0 : index
    %c0_7 = arith.constant 0 : index
    %3 = vector.load %arg1[%c0_5, %c0_6, %c0_7] : memref<2x16x8xf32, #tpu.memory_space<vmem>>, vector<2x16x8xf32>
    %4 = vector.shape_cast %3 : vector<2x16x8xf32> to vector<32x8xf32>
    %c0_8 = arith.constant 0 : index
    %c0_9 = arith.constant 0 : index
    %5 = vector.load %arg5[%c0_8, %c0_9] : memref<16x16xbf16, #tpu.memory_space<vmem>>, vector<16x16xbf16>
    %c0_10 = arith.constant 0 : index
    %c0_11 = arith.constant 0 : index
    %6 = vector.load %arg6[%c0_10, %c0_11] : memref<1x16xf32, #tpu.memory_space<vmem>>, vector<1x16xf32>
    %7 = vector.shape_cast %4 : vector<32x8xf32> to vector<2x16x8xf32>
    %8 = arith.truncf %7 : vector<2x16x8xf32> to vector<2x16x8xbf16>
    "tpu.trace_start"() <{level = 10 : i32, message = "bnm,bmf->bnf"}> : () -> ()
    %cst = arith.constant dense<0.000000e+00> : vector<2x16x8xf32>
    %9 = tpu.matmul %0, %8, %cst {dimension_numbers = #tpu.dot_dimension_numbers<[2], [1], [1], [2], [0, 0, 0, 1, 1, 2], [0], [0]>} : vector<2x16x16xbf16>, vector<2x16x8xbf16>, vector<2x16x8xf32> -> vector<2x16x8xf32>
    "tpu.trace_stop"() : () -> ()
    %10 = vector.shape_cast %9 : vector<2x16x8xf32> to vector<32x8xf32>
    %11 = tpu.concatenate %10, %4 in 1 : vector<32x8xf32>, vector<32x8xf32> -> vector<32x16xf32>
    %12 = arith.truncf %11 : vector<32x16xf32> to vector<32x16xbf16>
    %cst_12 = arith.constant dense<0.000000e+00> : vector<32x16xf32>
    %13 = tpu.matmul %12, %5, %cst_12 {dimension_numbers = #tpu.dot_dimension_numbers<[1], [0], [0], [1], [0, 0, 1, 1], [], []>} : vector<32x16xbf16>, vector<16x16xbf16>, vector<32x16xf32> -> vector<32x16xf32>
    %14 = vector.broadcast %6 : vector<1x16xf32> to vector<32x16xf32>
    %15 = arith.addf %13, %14 : vector<32x16xf32>
    %16 = vector.broadcast %2 : vector<32x1xf32> to vector<32x16xf32>
    %17 = arith.mulf %15, %16 : vector<32x16xf32>
    %cst_13 = arith.constant 0.00999999977 : f32
    %18 = vector.broadcast %cst_13 : f32 to vector<32x16xf32>
    %19 = arith.mulf %18, %17 : vector<32x16xf32>
    %20 = arith.maximumf %17, %19 : vector<32x16xf32>
    %c0_14 = arith.constant 0 : index
    %c0_15 = arith.constant 0 : index
    %21 = vector.load %arg7[%c0_14, %c0_15] : memref<32x32xbf16, #tpu.memory_space<vmem>>, vector<32x32xbf16>
    %c0_16 = arith.constant 0 : index
    %c0_17 = arith.constant 0 : index
    %22 = vector.load %arg8[%c0_16, %c0_17] : memref<1x32xf32, #tpu.memory_space<vmem>>, vector<1x32xf32>
    %23 = vector.shape_cast %20 : vector<32x16xf32> to vector<2x16x16xf32>
    %24 = arith.truncf %23 : vector<2x16x16xf32> to vector<2x16x16xbf16>
    "tpu.trace_start"() <{level = 10 : i32, message = "bnm,bmf->bnf"}> : () -> ()
    %cst_18 = arith.constant dense<0.000000e+00> : vector<2x16x16xf32>
    %25 = tpu.matmul %0, %24, %cst_18 {dimension_numbers = #tpu.dot_dimension_numbers<[2], [1], [1], [2], [0, 0, 0, 1, 1, 2], [0], [0]>} : vector<2x16x16xbf16>, vector<2x16x16xbf16>, vector<2x16x16xf32> -> vector<2x16x16xf32>
    "tpu.trace_stop"() : () -> ()
    %26 = vector.shape_cast %25 : vector<2x16x16xf32> to vector<32x16xf32>
    %27 = tpu.concatenate %26, %20 in 1 : vector<32x16xf32>, vector<32x16xf32> -> vector<32x32xf32>
    %28 = arith.truncf %27 : vector<32x32xf32> to vector<32x32xbf16>
    %cst_19 = arith.constant dense<0.000000e+00> : vector<32x32xf32>
    %29 = tpu.matmul %28, %21, %cst_19 {dimension_numbers = #tpu.dot_dimension_numbers<[1], [0], [0], [1], [0, 0, 1, 1], [], []>} : vector<32x32xbf16>, vector<32x32xbf16>, vector<32x32xf32> -> vector<32x32xf32>
    %30 = vector.broadcast %22 : vector<1x32xf32> to vector<32x32xf32>
    %31 = arith.addf %29, %30 : vector<32x32xf32>
    %32 = vector.broadcast %2 : vector<32x1xf32> to vector<32x32xf32>
    %33 = arith.mulf %31, %32 : vector<32x32xf32>
    %cst_20 = arith.constant 0.00999999977 : f32
    %34 = vector.broadcast %cst_20 : f32 to vector<32x32xf32>
    %35 = arith.mulf %34, %33 : vector<32x32xf32>
    %36 = arith.maximumf %33, %35 : vector<32x32xf32>
    %c0_21 = arith.constant 0 : index
    %c0_22 = arith.constant 0 : index
    %c0_23 = arith.constant 0 : index
    %37 = vector.load %arg4[%c0_21, %c0_22, %c0_23] : memref<2x16x32xf32, #tpu.memory_space<vmem>>, vector<2x16x32xf32>
    %38 = vector.shape_cast %37 : vector<2x16x32xf32> to vector<32x32xf32>
    %39 = arith.mulf %36, %38 : vector<32x32xf32>
    %c0_24 = arith.constant 0 : index
    %c0_25 = arith.constant 0 : index
    %40 = vector.load %arg9[%c0_24, %c0_25] : memref<32x2xbf16, #tpu.memory_space<vmem>>, vector<32x2xbf16>
    %c0_26 = arith.constant 0 : index
    %c0_27 = arith.constant 0 : index
    %41 = vector.load %arg10[%c0_26, %c0_27] : memref<1x2xf32, #tpu.memory_space<vmem>>, vector<1x2xf32>
    %42 = arith.truncf %39 : vector<32x32xf32> to vector<32x32xbf16>
    %cst_28 = arith.constant dense<0.000000e+00> : vector<32x2xf32>
    %43 = tpu.matmul %42, %40, %cst_28 {dimension_numbers = #tpu.dot_dimension_numbers<[1], [0], [0], [1], [0, 0, 1, 1], [], []>} : vector<32x32xbf16>, vector<32x2xbf16>, vector<32x2xf32> -> vector<32x2xf32>
    %44 = vector.broadcast %41 : vector<1x2xf32> to vector<32x2xf32>
    %45 = arith.addf %43, %44 : vector<32x2xf32>
    %46 = vector.extract_strided_slice %45 {offsets = [0, 0], sizes = [32, 1], strides = [1, 1]} : vector<32x2xf32> to vector<32x1xf32>
    %47 = arith.negf %46 : vector<32x1xf32>
    %48 = math.exp %47 : vector<32x1xf32>
    %cst_29 = arith.constant 1.000000e+00 : f32
    %49 = vector.broadcast %cst_29 : f32 to vector<32x1xf32>
    %50 = arith.addf %49, %48 : vector<32x1xf32>
    %51 = arith.divf %49, %50 : vector<32x1xf32>
    %52 = vector.extract_strided_slice %45 {offsets = [0, 1], sizes = [32, 1], strides = [1, 1]} : vector<32x2xf32> to vector<32x1xf32>
    %53 = math.tanh %52 : vector<32x1xf32>
    %54 = arith.mulf %51, %53 : vector<32x1xf32>
    %55 = vector.shape_cast %54 : vector<32x1xf32> to vector<2x16x1xf32>
    %cst_30 = arith.constant dense<0.000000e+00> : vector<2x1xf32>
    %56 = vector.multi_reduction <add>, %55, %cst_30 [1] : vector<2x16x1xf32> to vector<2x1xf32>
    %c0_31 = arith.constant 0 : index
    %c0_32 = arith.constant 0 : index
    %57 = vector.load %arg11[%c0_31, %c0_32] : memref<2x1xf32, #tpu.memory_space<vmem>>, vector<2x1xf32>
    tpu.vector_store %arg11[%c0_31, %c0_32], %56 {strides = array<i32>} : memref<2x1xf32, #tpu.memory_space<vmem>>, vector<2x1xf32>,
    return
  }
  func.func @transform_0(%arg0: i32) -> (i32, i32, i32) {
    %c0_i32 = arith.constant 0 : i32
    %c0_i32_0 = arith.constant 0 : i32
    %c0_i32_1 = arith.constant 0 : i32
    return %arg0, %c0_i32, %c0_i32_0 : i32, i32, i32
  }
  func.func @transform_1(%arg0: i32) -> (i32, i32, i32) {
    %c0_i32 = arith.constant 0 : i32
    %c0_i32_0 = arith.constant 0 : i32
    %c0_i32_1 = arith.constant 0 : i32
    return %arg0, %c0_i32, %c0_i32_0 : i32, i32, i32
  }
  func.func @transform_2(%arg0: i32) -> (i32, i32, i32) {
    %c0_i32 = arith.constant 0 : i32
    %c0_i32_0 = arith.constant 0 : i32
    %c0_i32_1 = arith.constant 0 : i32
    return %arg0, %c0_i32, %c0_i32_0 : i32, i32, i32
  }
  func.func @transform_3(%arg0: i32) -> (i32, i32, i32) {
    %c0_i32 = arith.constant 0 : i32
    %c0_i32_0 = arith.constant 0 : i32
    %c0_i32_1 = arith.constant 0 : i32
    return %arg0, %c0_i32, %c0_i32_0 : i32, i32, i32
  }
  func.func @transform_4(%arg0: i32) -> (i32, i32) {
    %c0_i32 = arith.constant 0 : i32
    %c0_i32_0 = arith.constant 0 : i32
    %c0_i32_1 = arith.constant 0 : i32
    return %c0_i32, %c0_i32_0 : i32, i32
  }
  func.func @transform_5(%arg0: i32) -> (i32, i32) {
    %c0_i32 = arith.constant 0 : i32
    %c0_i32_0 = arith.constant 0 : i32
    %c0_i32_1 = arith.constant 0 : i32
    return %c0_i32, %c0_i32_0 : i32, i32
  }
  func.func @transform_6(%arg0: i32) -> (i32, i32) {
    %c0_i32 = arith.constant 0 : i32
    %c0_i32_0 = arith.constant 0 : i32
    %c0_i32_1 = arith.constant 0 : i32
    return %c0_i32, %c0_i32_0 : i32, i32
  }
  func.func @transform_7(%arg0: i32) -> (i32, i32) {
    %c0_i32 = arith.constant 0 : i32
    %c0_i32_0 = arith.constant 0 : i32
    %c0_i32_1 = arith.constant 0 : i32
    return %c0_i32, %c0_i32_0 : i32, i32
  }
  func.func @transform_8(%arg0: i32) -> (i32, i32) {
    %c0_i32 = arith.constant 0 : i32
    %c0_i32_0 = arith.constant 0 : i32
    %c0_i32_1 = arith.constant 0 : i32
    return %c0_i32, %c0_i32_0 : i32, i32
  }
  func.func @transform_9(%arg0: i32) -> (i32, i32) {
    %c0_i32 = arith.constant 0 : i32
    %c0_i32_0 = arith.constant 0 : i32
    %c0_i32_1 = arith.constant 0 : i32
    return %c0_i32, %c0_i32_0 : i32, i32
  }
  func.func @transform_10(%arg0: i32) -> (i32, i32) {
    %c0_i32 = arith.constant 0 : i32
    %c0_i32_0 = arith.constant 0 : i32
    return %arg0, %c0_i32 : i32, i32
  }
}

</mosaic_0001>

<llo_original>
// kernel: tpu_custom_call.1
$region0: #{tpu_custom_call.1}
  #allocation0 [shape = 'u32[]', space=smem, size = 0x4, offset = 0x4, fixed_abs, tag = 'smem constant byte address 0x4 - core index']
  #allocation1 [shape = 'u32[144,128]{1,0:T(1,128)}', space=vmem, size = 0x12000, scoped, tag = 'internal scratch']
  %s0 = inlined_call_operand.vmem [shape: f32[2,16,8], index: 0, kind: input, shape index: {}]
  %s1 = inlined_call_operand.vmem [shape: bf16[2,16,16], index: 1, kind: input, shape index: {}]
  %s2 = inlined_call_operand.vmem [shape: f32[2,16,1], index: 2, kind: input, shape index: {}]
  %s3 = inlined_call_operand.vmem [shape: f32[2,16,32], index: 3, kind: input, shape index: {}]
  %s4 = inlined_call_operand.vmem [shape: bf16[16,16], index: 4, kind: input, shape index: {}]
  %s5 = inlined_call_operand.vmem [shape: f32[1,16], index: 5, kind: input, shape index: {}]
  %s6 = inlined_call_operand.vmem [shape: bf16[32,32], index: 6, kind: input, shape index: {}]
  %s7 = inlined_call_operand.vmem [shape: f32[1,32], index: 7, kind: input, shape index: {}]
  %s8 = inlined_call_operand.vmem [shape: bf16[32,2], index: 8, kind: input, shape index: {}]
  %s9 = inlined_call_operand.vmem [shape: f32[1,2], index: 9, kind: input, shape index: {}]
  %s10 = inlined_call_operand.vmem [shape: f32[2,1], index: 10, kind: output, shape index: {}]
  %s11 = sld [smem:[#allocation0]]
  $region50: #{tpu_custom_call.1} parent=0
    _
  %s13 = ssub.s32 1, %s11
  %s14 = scalar_select 0, %s13, %s11
  // Predicated region
  $region2: #{tpu_custom_call.1} parent=0 // pred_check
    _
  $region3: #{tpu_custom_call.1} parent=0 // pred_check_branch
    %16 = sbr.rel (0) target = $region5
  $region4: #{tpu_custom_call.1} parent=0 // pred_region
    _
  $region5: #{tpu_custom_call.1} parent=0 // pred_fallthru
    _
  // Predicated region
  $region6: #{tpu_custom_call.1} parent=0 // pred_check
    _
  $region7: #{tpu_custom_call.1} parent=0 // pred_check_branch
    %18 = sbr.rel (0) target = $region9
  $region8: #{tpu_custom_call.1} parent=0 // pred_region
    _
  $region9: #{tpu_custom_call.1} parent=0 // pred_fallthru
    _
  // Predicated region
  $region10: #{tpu_custom_call.1} parent=0 // pred_check
    _
  $region11: #{tpu_custom_call.1} parent=0 // pred_check_branch
    %20 = sbr.rel (0) target = $region13
  $region12: #{tpu_custom_call.1} parent=0 // pred_region
    _
  $region13: #{tpu_custom_call.1} parent=0 // pred_fallthru
    _
  // Predicated region
  $region14: #{tpu_custom_call.1} parent=0 // pred_check
    _
  $region15: #{tpu_custom_call.1} parent=0 // pred_check_branch
    %22 = sbr.rel (0) target = $region17
  $region16: #{tpu_custom_call.1} parent=0 // pred_region
    _
  $region17: #{tpu_custom_call.1} parent=0 // pred_fallthru
    _
  // Predicated region
  $region18: #{tpu_custom_call.1} parent=0 // pred_check
    _
  $region19: #{tpu_custom_call.1} parent=0 // pred_check_branch
    %24 = sbr.rel (0) target = $region21
  $region20: #{tpu_custom_call.1} parent=0 // pred_region
    _
  $region21: #{tpu_custom_call.1} parent=0 // pred_fallthru
    _
  // Predicated region
  $region22: #{tpu_custom_call.1} parent=0 // pred_check
    _
  $region23: #{tpu_custom_call.1} parent=0 // pred_check_branch
    %26 = sbr.rel (0) target = $region25
  $region24: #{tpu_custom_call.1} parent=0 // pred_region
    _
  $region25: #{tpu_custom_call.1} parent=0 // pred_fallthru
    _
  // Predicated region
  $region26: #{tpu_custom_call.1} parent=0 // pred_check
    _
  $region27: #{tpu_custom_call.1} parent=0 // pred_check_branch
    %28 = sbr.rel (0) target = $region29
  $region28: #{tpu_custom_call.1} parent=0 // pred_region
    _
  $region29: #{tpu_custom_call.1} parent=0 // pred_fallthru
    _
  // Predicated region
  $region30: #{tpu_custom_call.1} parent=0 // pred_check
    _
  $region31: #{tpu_custom_call.1} parent=0 // pred_check_branch
    %30 = sbr.rel (0) target = $region33
  $region32: #{tpu_custom_call.1} parent=0 // pred_region
    _
  $region33: #{tpu_custom_call.1} parent=0 // pred_fallthru
    _
  // Predicated region
  $region34: #{tpu_custom_call.1} parent=0 // pred_check
    _
  $region35: #{tpu_custom_call.1} parent=0 // pred_check_branch
    %32 = sbr.rel (0) target = $region37
  $region36: #{tpu_custom_call.1} parent=0 // pred_region
    _
  $region37: #{tpu_custom_call.1} parent=0 // pred_fallthru
    _
  // Predicated region
  $region38: #{tpu_custom_call.1} parent=0 // pred_check
    _
  $region39: #{tpu_custom_call.1} parent=0 // pred_check_branch
    %34 = sbr.rel (0) target = $region41
  $region40: #{tpu_custom_call.1} parent=0 // pred_region
    _
  $region41: #{tpu_custom_call.1} parent=0 // pred_fallthru
    _
  %v36 = vld [vmem:[%s1] sm:$0xf]
  %v37 = vld [vmem:[%s1 + $0x4] sm:$0xf]
  %v38 = vld [vmem:[%s1 + $0x8] sm:$0xf]
  %v39 = vld [vmem:[%s1 + $0xc] sm:$0xf]
  %v40 = vld [vmem:[%s2] sm:$0xff]
  %v41 = vld [vmem:[%s2 + $0x8] sm:$0xff]
  %v42 = vld [vmem:[%s2 + $0x10] sm:$0xff]
  %v43 = vld [vmem:[%s2 + $0x18] sm:$0xff]
  %v44 = vld [vmem:[%s0] sm:$0xff]
  %v45 = vld [vmem:[%s0 + $0x8] sm:$0xff]
  %v46 = vld [vmem:[%s0 + $0x10] sm:$0xff]
  %v47 = vld [vmem:[%s0 + $0x18] sm:$0xff]
  %v48 = vld [vmem:[%s4] sm:$0xf]
  %v49 = vld [vmem:[%s4 + $0x4] sm:$0xf]
  %v50 = vld [vmem:[%s5] sm:$0x1]
  %v51 = vpack.c.bf16 %v45, %v44
  %v52 = vpack.c.bf16 %v47, %v46
  %v55 = vunpack.c.l.b16 %v36
  %v56 = vunpack.c.l.b16 %v37
  %v57 = vpack.c.b16 %v56, %v55
  %vm58 = vcmask 130048
  %v60 = vsel %vm58, %v57, 0
  %62 = vmatprep.subr.bf16.mxu0 0
  %63 = vmatpush1.bf16.msra.mxu0 %v51
  %64 = vmatprep.subr.bf16.mxu0 0
  %65 = vmatpush1.bf16.msra.mxu0 0
  %66 = vmatprep.subr.bf16.mxu0 0
  %67 = vmatpush1.bf16.msra.mxu0 0
  %68 = vmatprep.subr.bf16.mxu0 0
  %69 = vmatpush1.bf16.msra.mxu0 0
  %70 = vmatprep.subr.bf16.mxu0 0
  %71 = vmatpush1.bf16.msra.mxu0 0
  %72 = vmatprep.subr.bf16.mxu0 0
  %73 = vmatpush1.bf16.msra.mxu0 0
  %74 = vmatprep.subr.bf16.mxu0 0
  %75 = vmatpush1.bf16.msra.mxu0 0
  %76 = vmatprep.subr.bf16.mxu0 0
  %77 = vmatpush1.bf16.msra.mxu0 0
  %78 = vmatprep.subr.bf16.mxu0 0
  %79 = vmatpush1.bf16.msra.mxu0 0
  %80 = vmatprep.subr.bf16.mxu0 0
  %81 = vmatpush1.bf16.msra.mxu0 0
  %82 = vmatprep.subr.bf16.mxu0 0
  %83 = vmatpush1.bf16.msra.mxu0 0
  %84 = vmatprep.subr.bf16.mxu0 0
  %85 = vmatpush1.bf16.msra.mxu0 0
  %86 = vmatprep.subr.bf16.mxu0 0
  %87 = vmatpush1.bf16.msra.mxu0 0
  %88 = vmatprep.subr.bf16.mxu0 0
  %89 = vmatpush1.bf16.msra.mxu0 0
  %90 = vmatprep.subr.bf16.mxu0 0
  %91 = vmatpush1.bf16.msra.mxu0 0
  %92 = vmatprep.subr.bf16.mxu0 0
  %93 = vmatpush1.bf16.msra.mxu0 0
  %94 = vmatprep.mubr.bf16.mxu0 0
  %95 = vmatmul.mubr.bf16.gmra.mrb[0].mxu0 %v60
  %v96 = vpop.f32.mrb[0].mxu0
  %v97 = vadd.f32 0.0, %v96
  %v98 = vpop.f32.mrb[0].mxu0
  %v99 = vpop.f32.mrb[0].mxu0
  %v100 = vadd.f32 0.0, %v99
  %v101 = vpop.f32.mrb[0].mxu0
  %102 = vdwg.mxu0
  %v105 = vunpack.c.l.b16 %v38
  %v106 = vunpack.c.l.b16 %v39
  %v107 = vpack.c.b16 %v106, %v105
  %v109 = vsel %vm58, %v107, 0
  %111 = vmatprep.subr.bf16.mxu0 0
  %112 = vmatpush1.bf16.msra.mxu0 %v52
  %113 = vmatprep.subr.bf16.mxu0 0
  %114 = vmatpush1.bf16.msra.mxu0 0
  %115 = vmatprep.subr.bf16.mxu0 0
  %116 = vmatpush1.bf16.msra.mxu0 0
  %117 = vmatprep.subr.bf16.mxu0 0
  %118 = vmatpush1.bf16.msra.mxu0 0
  %119 = vmatprep.subr.bf16.mxu0 0
  %120 = vmatpush1.bf16.msra.mxu0 0
  %121 = vmatprep.subr.bf16.mxu0 0
  %122 = vmatpush1.bf16.msra.mxu0 0
  %123 = vmatprep.subr.bf16.mxu0 0
  %124 = vmatpush1.bf16.msra.mxu0 0
  %125 = vmatprep.subr.bf16.mxu0 0
  %126 = vmatpush1.bf16.msra.mxu0 0
  %127 = vmatprep.subr.bf16.mxu0 0
  %128 = vmatpush1.bf16.msra.mxu0 0
  %129 = vmatprep.subr.bf16.mxu0 0
  %130 = vmatpush1.bf16.msra.mxu0 0
  %131 = vmatprep.subr.bf16.mxu0 0
  %132 = vmatpush1.bf16.msra.mxu0 0
  %133 = vmatprep.subr.bf16.mxu0 0
  %134 = vmatpush1.bf16.msra.mxu0 0
  %135 = vmatprep.subr.bf16.mxu0 0
  %136 = vmatpush1.bf16.msra.mxu0 0
  %137 = vmatprep.subr.bf16.mxu0 0
  %138 = vmatpush1.bf16.msra.mxu0 0
  %139 = vmatprep.subr.bf16.mxu0 0
  %140 = vmatpush1.bf16.msra.mxu0 0
  %141 = vmatprep.subr.bf16.mxu0 0
  %142 = vmatpush1.bf16.msra.mxu0 0
  %143 = vmatprep.mubr.bf16.mxu0 0
  %144 = vmatmul.mubr.bf16.gmra.mrb[0].mxu0 %v109
  %v145 = vpop.f32.mrb[0].mxu0
  %v146 = vadd.f32 0.0, %v145
  %v147 = vpop.f32.mrb[0].mxu0
  %v148 = vpop.f32.mrb[0].mxu0
  %v149 = vadd.f32 0.0, %v148
  %v150 = vpop.f32.mrb[0].mxu0
  %151 = vdwg.mxu0
  %156 = vrot.lane.b32.xlu0 %v44, 8
  %v157 = vpop.permute.xlu0 %156
  %158 = vrot.lane.b32.xlu0 %v45, 8
  %v159 = vpop.permute.xlu0 %158
  %160 = vrot.lane.b32.xlu0 %v46, 8
  %v161 = vpop.permute.xlu0 %160
  %162 = vrot.lane.b32.xlu0 %v47, 8
  %v163 = vpop.permute.xlu0 %162
  %vm168 = vcmask 64512
  %v169 = vsel %vm168, %v97, %v157
  %v170 = vsel %vm168, %v100, %v159
  %v171 = vsel %vm168, %v146, %v161
  %v172 = vsel %vm168, %v149, %v163
  %v173 = vpack.c.bf16 %v170, %v169
  %v174 = vpack.c.bf16 %v172, %v171
  %v176 = vlaneseq
  %v177 = vshrl.u32 %v176, 7
  %v178 = vsub.s32 0, %v177
  %v179 = vrot.slane %v50, %v178
  %v183 = vunpack.c.l.b16 %v48
  %v184 = vunpack.c.l.b16 %v49
  %v185 = vpack.c.b16 %v184, %v183
  %v188 = vsel %vm58, %v173, 0
  %v191 = vsel %vm58, %v174, 0
  %193 = vmatprep.subr.bf16.mxu0 0
  %194 = vmatpush1.bf16.msra.mxu0 %v185
  %195 = vmatprep.subr.bf16.mxu0 0
  %196 = vmatpush1.bf16.msra.mxu0 0
  %197 = vmatprep.subr.bf16.mxu0 0
  %198 = vmatpush1.bf16.msra.mxu0 0
  %199 = vmatprep.subr.bf16.mxu0 0
  %200 = vmatpush1.bf16.msra.mxu0 0
  %201 = vmatprep.subr.bf16.mxu0 0
  %202 = vmatpush1.bf16.msra.mxu0 0
  %203 = vmatprep.subr.bf16.mxu0 0
  %204 = vmatpush1.bf16.msra.mxu0 0
  %205 = vmatprep.subr.bf16.mxu0 0
  %206 = vmatpush1.bf16.msra.mxu0 0
  %207 = vmatprep.subr.bf16.mxu0 0
  %208 = vmatpush1.bf16.msra.mxu0 0
  %209 = vmatprep.subr.bf16.mxu0 0
  %210 = vmatpush1.bf16.msra.mxu0 0
  %211 = vmatprep.subr.bf16.mxu0 0
  %212 = vmatpush1.bf16.msra.mxu0 0
  %213 = vmatprep.subr.bf16.mxu0 0
  %214 = vmatpush1.bf16.msra.mxu0 0
  %215 = vmatprep.subr.bf16.mxu0 0
  %216 = vmatpush1.bf16.msra.mxu0 0
  %217 = vmatprep.subr.bf16.mxu0 0
  %218 = vmatpush1.bf16.msra.mxu0 0
  %219 = vmatprep.subr.bf16.mxu0 0
  %220 = vmatpush1.bf16.msra.mxu0 0
  %221 = vmatprep.subr.bf16.mxu0 0
  %222 = vmatpush1.bf16.msra.mxu0 0
  %223 = vmatprep.subr.bf16.mxu0 0
  %224 = vmatpush1.bf16.msra.mxu0 0
  %225 = vmatprep.mubr.bf16.mxu0 0
  %226 = vmatmul.mubr.bf16.gmra.mrb[0].mxu0 %v188
  %v227 = vpop.f32.mrb[0].mxu0
  %v228 = vadd.f32 %v179, %v227
  %v229 = vpop.f32.mrb[0].mxu0
  %v230 = vpop.f32.mrb[0].mxu0
  %v231 = vadd.f32 %v179, %v230
  %v232 = vpop.f32.mrb[0].mxu0
  %233 = vmatprep.mubr.bf16.mxu0 0
  %234 = vmatmul.mubr.bf16.gmra.mrb[0].mxu0 %v191
  %v235 = vpop.f32.mrb[0].mxu0
  %v236 = vadd.f32 %v179, %v235
  %v237 = vpop.f32.mrb[0].mxu0
  %v238 = vpop.f32.mrb[0].mxu0
  %v239 = vadd.f32 %v179, %v238
  %v240 = vpop.f32.mrb[0].mxu0
  %241 = vdwg.mxu0
  %243 = vset.pattern.permute.xlu0 0
  %244 = vperm.xlu0 %243, %v40
  %v245 = vpop.permute.xlu0 %244
  %248 = vset.pattern.permute.xlu0 0
  %249 = vperm.xlu0 %248, %v41
  %v250 = vpop.permute.xlu0 %249
  %253 = vset.pattern.permute.xlu0 0
  %254 = vperm.xlu0 %253, %v42
  %v255 = vpop.permute.xlu0 %254
  %258 = vset.pattern.permute.xlu0 0
  %259 = vperm.xlu0 %258, %v43
  %v260 = vpop.permute.xlu0 %259
  %v262 = vmul.f32 %v228, %v245
  %v263 = vmul.f32 %v231, %v250
  %v264 = vmul.f32 %v236, %v255
  %v265 = vmul.f32 %v239, %v260
  %v266 = vmul.f32 %v262, 0.01
  %v267 = vmul.f32 %v263, 0.01
  %v268 = vmul.f32 %v264, 0.01
  %v269 = vmul.f32 %v265, 0.01
  %v270 = vmax.f32 %v262, %v266
  %v271 = vmax.f32 %v263, %v267
  %v272 = vmax.f32 %v264, %v268
  %v273 = vmax.f32 %v265, %v269
  %v274 = vld [vmem:[%s6] sm:$0xf]
  %v275 = vld [vmem:[%s6 + $0x4] sm:$0xf]
  %v276 = vld [vmem:[%s6 + $0x8] sm:$0xf]
  %v277 = vld [vmem:[%s6 + $0xc] sm:$0xf]
  %v278 = vld [vmem:[%s7] sm:$0x1]
  %v279 = vpack.c.bf16 %v271, %v270
  %v280 = vpack.c.bf16 %v273, %v272
  %281 = vmatprep.subr.bf16.mxu0 0
  %282 = vmatpush1.bf16.msra.mxu0 %v279
  %283 = vmatprep.subr.bf16.mxu0 0
  %284 = vmatpush1.bf16.msra.mxu0 0
  %285 = vmatprep.subr.bf16.mxu0 0
  %286 = vmatpush1.bf16.msra.mxu0 0
  %287 = vmatprep.subr.bf16.mxu0 0
  %288 = vmatpush1.bf16.msra.mxu0 0
  %289 = vmatprep.subr.bf16.mxu0 0
  %290 = vmatpush1.bf16.msra.mxu0 0
  %291 = vmatprep.subr.bf16.mxu0 0
  %292 = vmatpush1.bf16.msra.mxu0 0
  %293 = vmatprep.subr.bf16.mxu0 0
  %294 = vmatpush1.bf16.msra.mxu0 0
  %295 = vmatprep.subr.bf16.mxu0 0
  %296 = vmatpush1.bf16.msra.mxu0 0
  %297 = vmatprep.subr.bf16.mxu0 0
  %298 = vmatpush1.bf16.msra.mxu0 0
  %299 = vmatprep.subr.bf16.mxu0 0
  %300 = vmatpush1.bf16.msra.mxu0 0
  %301 = vmatprep.subr.bf16.mxu0 0
  %302 = vmatpush1.bf16.msra.mxu0 0
  %303 = vmatprep.subr.bf16.mxu0 0
  %304 = vmatpush1.bf16.msra.mxu0 0
  %305 = vmatprep.subr.bf16.mxu0 0
  %306 = vmatpush1.bf16.msra.mxu0 0
  %307 = vmatprep.subr.bf16.mxu0 0
  %308 = vmatpush1.bf16.msra.mxu0 0
  %309 = vmatprep.subr.bf16.mxu0 0
  %310 = vmatpush1.bf16.msra.mxu0 0
  %311 = vmatprep.subr.bf16.mxu0 0
  %312 = vmatpush1.bf16.msra.mxu0 0
  %313 = vmatprep.mubr.bf16.mxu0 0
  %314 = vmatmul.mubr.bf16.gmra.mrb[0].mxu0 %v60
  %v315 = vpop.f32.mrb[0].mxu0
  %v316 = vadd.f32 0.0, %v315
  %v317 = vpop.f32.mrb[0].mxu0
  %v318 = vpop.f32.mrb[0].mxu0
  %v319 = vadd.f32 0.0, %v318
  %v320 = vpop.f32.mrb[0].mxu0
  %321 = vdwg.mxu0
  %322 = vmatprep.subr.bf16.mxu0 0
  %323 = vmatpush1.bf16.msra.mxu0 %v280
  %324 = vmatprep.subr.bf16.mxu0 0
  %325 = vmatpush1.bf16.msra.mxu0 0
  %326 = vmatprep.subr.bf16.mxu0 0
  %327 = vmatpush1.bf16.msra.mxu0 0
  %328 = vmatprep.subr.bf16.mxu0 0
  %329 = vmatpush1.bf16.msra.mxu0 0
  %330 = vmatprep.subr.bf16.mxu0 0
  %331 = vmatpush1.bf16.msra.mxu0 0
  %332 = vmatprep.subr.bf16.mxu0 0
  %333 = vmatpush1.bf16.msra.mxu0 0
  %334 = vmatprep.subr.bf16.mxu0 0
  %335 = vmatpush1.bf16.msra.mxu0 0
  %336 = vmatprep.subr.bf16.mxu0 0
  %337 = vmatpush1.bf16.msra.mxu0 0
  %338 = vmatprep.subr.bf16.mxu0 0
  %339 = vmatpush1.bf16.msra.mxu0 0
  %340 = vmatprep.subr.bf16.mxu0 0
  %341 = vmatpush1.bf16.msra.mxu0 0
  %342 = vmatprep.subr.bf16.mxu0 0
  %343 = vmatpush1.bf16.msra.mxu0 0
  %344 = vmatprep.subr.bf16.mxu0 0
  %345 = vmatpush1.bf16.msra.mxu0 0
  %346 = vmatprep.subr.bf16.mxu0 0
  %347 = vmatpush1.bf16.msra.mxu0 0
  %348 = vmatprep.subr.bf16.mxu0 0
  %349 = vmatpush1.bf16.msra.mxu0 0
  %350 = vmatprep.subr.bf16.mxu0 0
  %351 = vmatpush1.bf16.msra.mxu0 0
  %352 = vmatprep.subr.bf16.mxu0 0
  %353 = vmatpush1.bf16.msra.mxu0 0
  %354 = vmatprep.mubr.bf16.mxu0 0
  %355 = vmatmul.mubr.bf16.gmra.mrb[0].mxu0 %v109
  %v356 = vpop.f32.mrb[0].mxu0
  %v357 = vadd.f32 0.0, %v356
  %v358 = vpop.f32.mrb[0].mxu0
  %v359 = vpop.f32.mrb[0].mxu0
  %v360 = vadd.f32 0.0, %v359
  %v361 = vpop.f32.mrb[0].mxu0
  %362 = vdwg.mxu0
  %367 = vrot.lane.b32.xlu0 %v270, 16
  %v368 = vpop.permute.xlu0 %367
  %369 = vrot.lane.b32.xlu0 %v271, 16
  %v370 = vpop.permute.xlu0 %369
  %371 = vrot.lane.b32.xlu0 %v272, 16
  %v372 = vpop.permute.xlu0 %371
  %373 = vrot.lane.b32.xlu0 %v273, 16
  %v374 = vpop.permute.xlu0 %373
  %v379 = vsel %vm58, %v316, %v368
  %v380 = vsel %vm58, %v319, %v370
  %v381 = vsel %vm58, %v357, %v372
  %v382 = vsel %vm58, %v360, %v374
  %v383 = vpack.c.bf16 %v380, %v379
  %v384 = vpack.c.bf16 %v382, %v381
  %v386 = vlaneseq
  %v387 = vshrl.u32 %v386, 7
  %v388 = vsub.s32 0, %v387
  %v389 = vrot.slane %v278, %v388
  %v395 = vunpack.c.l.b16 %v274
  %v396 = vunpack.c.l.b16 %v275
  %v397 = vunpack.c.l.b16 %v276
  %v398 = vunpack.c.l.b16 %v277
  %v399 = vpack.c.b16 %v396, %v395
  %v400 = vpack.c.b16 %v398, %v397
  %vm403 = vcmask 261120
  %v405 = vsel %vm403, %v383, 0
  %v408 = vsel %vm403, %v384, 0
  %410 = vmatprep.subr.bf16.mxu0 0
  %411 = vmatpush1.bf16.msra.mxu0 %v399
  %412 = vmatprep.subr.bf16.mxu0 0
  %413 = vmatpush1.bf16.msra.mxu0 %v400
  %414 = vmatprep.subr.bf16.mxu0 0
  %415 = vmatpush1.bf16.msra.mxu0 0
  %416 = vmatprep.subr.bf16.mxu0 0
  %417 = vmatpush1.bf16.msra.mxu0 0
  %418 = vmatprep.subr.bf16.mxu0 0
  %419 = vmatpush1.bf16.msra.mxu0 0
  %420 = vmatprep.subr.bf16.mxu0 0
  %421 = vmatpush1.bf16.msra.mxu0 0
  %422 = vmatprep.subr.bf16.mxu0 0
  %423 = vmatpush1.bf16.msra.mxu0 0
  %424 = vmatprep.subr.bf16.mxu0 0
  %425 = vmatpush1.bf16.msra.mxu0 0
  %426 = vmatprep.subr.bf16.mxu0 0
  %427 = vmatpush1.bf16.msra.mxu0 0
  %428 = vmatprep.subr.bf16.mxu0 0
  %429 = vmatpush1.bf16.msra.mxu0 0
  %430 = vmatprep.subr.bf16.mxu0 0
  %431 = vmatpush1.bf16.msra.mxu0 0
  %432 = vmatprep.subr.bf16.mxu0 0
  %433 = vmatpush1.bf16.msra.mxu0 0
  %434 = vmatprep.subr.bf16.mxu0 0
  %435 = vmatpush1.bf16.msra.mxu0 0
  %436 = vmatprep.subr.bf16.mxu0 0
  %437 = vmatpush1.bf16.msra.mxu0 0
  %438 = vmatprep.subr.bf16.mxu0 0
  %439 = vmatpush1.bf16.msra.mxu0 0
  %440 = vmatprep.subr.bf16.mxu0 0
  %441 = vmatpush1.bf16.msra.mxu0 0
  %442 = vmatprep.mubr.bf16.mxu0 0
  %443 = vmatmul.mubr.bf16.gmra.mrb[0].mxu0 %v405
  %v444 = vpop.f32.mrb[0].mxu0
  %v445 = vadd.f32 %v389, %v444
  %v446 = vpop.f32.mrb[0].mxu0
  %v447 = vpop.f32.mrb[0].mxu0
  %v448 = vadd.f32 %v389, %v447
  %v449 = vpop.f32.mrb[0].mxu0
  %450 = vmatprep.mubr.bf16.mxu0 0
  %451 = vmatmul.mubr.bf16.gmra.mrb[0].mxu0 %v408
  %v452 = vpop.f32.mrb[0].mxu0
  %v453 = vadd.f32 %v389, %v452
  %v454 = vpop.f32.mrb[0].mxu0
  %v455 = vpop.f32.mrb[0].mxu0
  %v456 = vadd.f32 %v389, %v455
  %v457 = vpop.f32.mrb[0].mxu0
  %458 = vdwg.mxu0
  %v459 = vmul.f32 %v445, %v245
  %v460 = vmul.f32 %v448, %v250
  %v461 = vmul.f32 %v453, %v255
  %v462 = vmul.f32 %v456, %v260
  %v463 = vmul.f32 %v459, 0.01
  %v464 = vmul.f32 %v460, 0.01
  %v465 = vmul.f32 %v461, 0.01
  %v466 = vmul.f32 %v462, 0.01
  %v467 = vmax.f32 %v459, %v463
  %v468 = vmax.f32 %v460, %v464
  %v469 = vmax.f32 %v461, %v465
  %v470 = vmax.f32 %v462, %v466
  %v471 = vld [vmem:[%s3] sm:$0xff]
  %v472 = vld [vmem:[%s3 + $0x8] sm:$0xff]
  %v473 = vld [vmem:[%s3 + $0x10] sm:$0xff]
  %v474 = vld [vmem:[%s3 + $0x18] sm:$0xff]
  %v475 = vmul.f32 %v467, %v471
  %v476 = vmul.f32 %v468, %v472
  %v477 = vmul.f32 %v469, %v473
  %v478 = vmul.f32 %v470, %v474
  %v479 = vld [vmem:[%s8] sm:$0xf]
  %v480 = vld [vmem:[%s8 + $0x4] sm:$0xf]
  %v481 = vld [vmem:[%s8 + $0x8] sm:$0xf]
  %v482 = vld [vmem:[%s8 + $0xc] sm:$0xf]
  %v483 = vld [vmem:[%s9] sm:$0x1]
  %v484 = vpack.c.bf16 %v476, %v475
  %v485 = vpack.c.bf16 %v478, %v477
  %v487 = vlaneseq
  %v488 = vshrl.u32 %v487, 7
  %v489 = vsub.s32 0, %v488
  %v490 = vrot.slane %v483, %v489
  %v496 = vunpack.c.l.b16 %v479
  %v497 = vunpack.c.l.b16 %v480
  %v498 = vunpack.c.l.b16 %v481
  %v499 = vunpack.c.l.b16 %v482
  %v500 = vpack.c.b16 %v497, %v496
  %v501 = vpack.c.b16 %v499, %v498
  %v505 = vsel %vm403, %v484, 0
  %v508 = vsel %vm403, %v485, 0
  %510 = vmatprep.subr.bf16.mxu0 0
  %511 = vmatpush1.bf16.msra.mxu0 %v500
  %512 = vmatprep.subr.bf16.mxu0 0
  %513 = vmatpush1.bf16.msra.mxu0 %v501
  %514 = vmatprep.subr.bf16.mxu0 0
  %515 = vmatpush1.bf16.msra.mxu0 0
  %516 = vmatprep.subr.bf16.mxu0 0
  %517 = vmatpush1.bf16.msra.mxu0 0
  %518 = vmatprep.subr.bf16.mxu0 0
  %519 = vmatpush1.bf16.msra.mxu0 0
  %520 = vmatprep.subr.bf16.mxu0 0
  %521 = vmatpush1.bf16.msra.mxu0 0
  %522 = vmatprep.subr.bf16.mxu0 0
  %523 = vmatpush1.bf16.msra.mxu0 0
  %524 = vmatprep.subr.bf16.mxu0 0
  %525 = vmatpush1.bf16.msra.mxu0 0
  %526 = vmatprep.subr.bf16.mxu0 0
  %527 = vmatpush1.bf16.msra.mxu0 0
  %528 = vmatprep.subr.bf16.mxu0 0
  %529 = vmatpush1.bf16.msra.mxu0 0
  %530 = vmatprep.subr.bf16.mxu0 0
  %531 = vmatpush1.bf16.msra.mxu0 0
  %532 = vmatprep.subr.bf16.mxu0 0
  %533 = vmatpush1.bf16.msra.mxu0 0
  %534 = vmatprep.subr.bf16.mxu0 0
  %535 = vmatpush1.bf16.msra.mxu0 0
  %536 = vmatprep.subr.bf16.mxu0 0
  %537 = vmatpush1.bf16.msra.mxu0 0
  %538 = vmatprep.subr.bf16.mxu0 0
  %539 = vmatpush1.bf16.msra.mxu0 0
  %540 = vmatprep.subr.bf16.mxu0 0
  %541 = vmatpush1.bf16.msra.mxu0 0
  %542 = vmatprep.mubr.bf16.mxu0 0
  %543 = vmatmul.mubr.bf16.gmra.mrb[0].mxu0 %v505
  %v544 = vpop.f32.mrb[0].mxu0
  %v545 = vadd.f32 %v490, %v544
  %v546 = vpop.f32.mrb[0].mxu0
  %v547 = vpop.f32.mrb[0].mxu0
  %v548 = vadd.f32 %v490, %v547
  %v549 = vpop.f32.mrb[0].mxu0
  %550 = vmatprep.mubr.bf16.mxu0 0
  %551 = vmatmul.mubr.bf16.gmra.mrb[0].mxu0 %v508
  %v552 = vpop.f32.mrb[0].mxu0
  %v553 = vadd.f32 %v490, %v552
  %v554 = vpop.f32.mrb[0].mxu0
  %v555 = vpop.f32.mrb[0].mxu0
  %v556 = vadd.f32 %v490, %v555
  %v557 = vpop.f32.mrb[0].mxu0
  %558 = vdwg.mxu0
  %v559 = vxor.u32 %v545, 2147483648
  %v560 = vxor.u32 %v548, 2147483648
  %v561 = vxor.u32 %v553, 2147483648
  %v562 = vxor.u32 %v556, 2147483648
  %v563 = vmul.f32 %v559, 1.442695
  %v564 = vpow.pop %v563
  %v565 = vmul.f32 %v560, 1.442695
  %v566 = vpow.pop %v565
  %v567 = vmul.f32 %v561, 1.442695
  %v568 = vpow.pop %v567
  %v569 = vmul.f32 %v562, 1.442695
  %v570 = vpow.pop %v569
  %v571 = vadd.f32 %v564, 1.0
  %v572 = vadd.f32 %v566, 1.0
  %v573 = vadd.f32 %v568, 1.0
  %v574 = vadd.f32 %v570, 1.0
  %v575 = vrcp.pop %v571
  %v576 = vmul.f32 1.0, %v575
  %v577 = vrcp.pop %v572
  %v578 = vmul.f32 1.0, %v577
  %v579 = vrcp.pop %v573
  %v580 = vmul.f32 1.0, %v579
  %v581 = vrcp.pop %v574
  %v582 = vmul.f32 1.0, %v581
  %v583 = vtanh.pop %v545
  %v584 = vtanh.pop %v548
  %v585 = vtanh.pop %v553
  %v586 = vtanh.pop %v556
  %591 = vrot.lane.b32.xlu0 %v583, 127
  %v592 = vpop.permute.xlu0 %591
  %593 = vrot.lane.b32.xlu0 %v584, 127
  %v594 = vpop.permute.xlu0 %593
  %595 = vrot.lane.b32.xlu0 %v585, 127
  %v596 = vpop.permute.xlu0 %595
  %597 = vrot.lane.b32.xlu0 %v586, 127
  %v598 = vpop.permute.xlu0 %597
  %v603 = vmul.f32 %v576, %v592
  %v604 = vmul.f32 %v578, %v594
  %v605 = vmul.f32 %v580, %v596
  %v606 = vmul.f32 %v582, %v598
  %vm607 = vcmask 7168
  %v608 = vsel %vm607, %v603, 0.0
  %v609 = vsel %vm607, %v604, 0.0
  %v610 = vadd.f32 %v608, %v609
  %v611 = vrot.slane %v610, 4
  %v612 = vadd.f32 %v610, %v611
  %v613 = vrot.slane %v612, 2
  %v614 = vadd.f32 %v612, %v613
  %v615 = vrot.slane %v614, 1
  %v616 = vadd.f32 %v614, %v615
  %v617 = vsel %vm607, %v605, 0.0
  %v618 = vsel %vm607, %v606, 0.0
  %v619 = vadd.f32 %v617, %v618
  %v620 = vrot.slane %v619, 4
  %v621 = vadd.f32 %v619, %v620
  %v622 = vrot.slane %v621, 2
  %v623 = vadd.f32 %v621, %v622
  %v624 = vrot.slane %v623, 1
  %v625 = vadd.f32 %v623, %v624
  %vm628 = vcmask 1041409
  %v629 = vsel %vm628, %v625, %v616
  %vm631 = vcmask 1024
  %632 = vst.msk [vmem:[%s10] sm:$0x3] %vm631, %v629
  // Predicated region
  $region42: #{tpu_custom_call.1} parent=0 // pred_check
    _
  $region43: #{tpu_custom_call.1} parent=0 // pred_check_branch
    %634 = sbr.rel (0) target = $region45
  $region44: #{tpu_custom_call.1} parent=0 // pred_region
    _
  $region45: #{tpu_custom_call.1} parent=0 // pred_fallthru
    _
  // Predicated region
  $region46: #{tpu_custom_call.1} parent=0 // pred_check
    _
  $region47: #{tpu_custom_call.1} parent=0 // pred_check_branch
    %636 = sbr.rel (0) target = $region49
  $region48: #{tpu_custom_call.1} parent=0 // pred_region
    _
  $region49: #{tpu_custom_call.1} parent=0 // pred_fallthru
    _

</llo_original>
